<compile_context>
chip_gen: v7x
topology: tpu7x:2x2x1
jax: 0.10.0
libtpu: 0.0.40
codegen_flags: <defaults>
</compile_context>

<pallas_src>
import jax
import jax.numpy as jnp
from jax.experimental import pallas as pl
from jax.experimental.pallas import tpu as pltpu  # noqa: F401  (TPU backend)

# ---------------- problem sizes (small, consistent with the module) ----------
B, T, H = 2, 8, 32          # batch, seq_len, hidden_size


# ---------------------------- Pallas kernel ----------------------------------
def attention_kernel(x_ref, w_ref, out_ref, attw_ref):
    """Fused attention forward.

    x_ref:    (B, T, H)  lstm_output
    w_ref:    (1, H)     nn.Linear(H, 1, bias=False) weight (PyTorch layout)
    out_ref:  (B, H)     weighted_output
    attw_ref: (B, T)     attention_weights
    """
    x = x_ref[...]                                     # (B, T, H) f32
    w = w_ref[...]                                     # (1, H)    f32

    xw = x * w                                         # broadcast over (B, T)

    # ---- attention weights output: lane-major (B, T) softmax over T --------
    s = jnp.sum(xw, axis=-1)                           # (B, T)   lane reduce
    m = jnp.max(s, axis=-1, keepdims=True)             # (B, 1)
    e = jnp.exp(s - m)
    attw_ref[...] = e / jnp.sum(e, axis=-1, keepdims=True)

    # ---- weighted output: keep T on sublanes, no reshape needed ------------
    s3 = jnp.sum(xw, axis=-1, keepdims=True)           # (B, T, 1)
    m3 = jnp.max(s3, axis=1, keepdims=True)            # (B, 1, 1)
    e3 = jnp.exp(s3 - m3)
    attw3 = e3 / jnp.sum(e3, axis=1, keepdims=True)    # (B, T, 1)
    out_ref[...] = jnp.sum(x * attw3, axis=1)          # (B, H)


# ---------------------------- wrapper -----------------------------------------
def attention_pallas(lstm_output, w_attention):
    b, t, h = lstm_output.shape
    return pl.pallas_call(
        attention_kernel,
        grid=(1,),
        in_specs=[
            pl.BlockSpec((b, t, h), lambda i: (0, 0, 0)),
            pl.BlockSpec((1, h), lambda i: (0, 0)),
        ],
        out_specs=(
            pl.BlockSpec((b, h), lambda i: (0, 0)),
            pl.BlockSpec((b, t), lambda i: (0, 0)),
        ),
        out_shape=(
            jax.ShapeDtypeStruct((b, h), jnp.float32),   # weighted_output
            jax.ShapeDtypeStruct((b, t), jnp.float32),   # attention_weights
        ),
    )(lstm_output, w_attention)


# ---------------------------- pure-JAX reference ------------------------------
def attention_reference(lstm_output, w_attention):
    hp = jax.lax.Precision.HIGHEST                     # reference-only precision
    scores = jnp.einsum("bth,h->bt", lstm_output, w_attention[0], precision=hp)
    weights = jax.nn.softmax(scores, axis=1)
    weighted = jnp.einsum("bt,bth->bh", weights, lstm_output, precision=hp)
    return weighted, weights


if __name__ == "__main__":
    key = jax.random.PRNGKey(0)
    k_x, k_w = jax.random.split(key)
    lstm_output = jax.random.normal(k_x, (B, T, H), jnp.float32)
    # nn.Linear(H, 1, bias=False): weight shape (1, H), U(-1/sqrt(H), 1/sqrt(H))
    bound = 1.0 / jnp.sqrt(float(H))
    w_attention = jax.random.uniform(k_w, (1, H), jnp.float32, -bound, bound)

    weighted, attw = jax.jit(attention_pallas)(lstm_output, w_attention)
    weighted = jax.block_until_ready(weighted)
    attw = jax.block_until_ready(attw)

    ref_weighted, ref_attw = attention_reference(lstm_output, w_attention)
    assert weighted.shape == (B, H), weighted.shape
    assert attw.shape == (B, T), attw.shape
    assert bool(jnp.allclose(attw, ref_attw, rtol=1e-3, atol=1e-3)), (
        "attention_weights mismatch vs JAX reference")
    assert bool(jnp.allclose(weighted, ref_weighted, rtol=1e-3, atol=1e-3)), (
        "weighted_output mismatch vs JAX reference")
    print("KERNEL_OK")
</pallas_src>

<mosaic_0001>
module attributes {stable_mosaic.version = 11 : i64} {
  func.func @attention_kernel(%arg0: i32, %arg1: memref<2x8x32xf32, #tpu.memory_space<vmem>>, %arg2: memref<1x32xf32, #tpu.memory_space<vmem>>, %arg3: memref<2x32xf32, #tpu.memory_space<vmem>>, %arg4: memref<2x8xf32, #tpu.memory_space<vmem>>) attributes {dimension_semantics = [#tpu.dimension_semantics<arbitrary>], iteration_bounds = array<i64: 1>, scalar_prefetch = 0 : i64, scratch_operands = 0 : i64, tpu.core_type = #tpu.core_type<tc>, window_params = [{pipeline_mode = #tpu.pipeline_mode<synchronous>, transform_indices = @transform_0, window_bounds = array<i64: 2, 8, 32>}, {pipeline_mode = #tpu.pipeline_mode<synchronous>, transform_indices = @transform_1, window_bounds = array<i64: 1, 32>}, {pipeline_mode = #tpu.pipeline_mode<synchronous>, transform_indices = @transform_2, window_bounds = array<i64: 2, 32>}, {pipeline_mode = #tpu.pipeline_mode<synchronous>, transform_indices = @transform_3, window_bounds = array<i64: 2, 8>}]} {
    %c0 = arith.constant 0 : index
    %c0_0 = arith.constant 0 : index
    %c0_1 = arith.constant 0 : index
    %0 = vector.load %arg1[%c0, %c0_0, %c0_1] : memref<2x8x32xf32, #tpu.memory_space<vmem>>, vector<2x8x32xf32>
    %c0_2 = arith.constant 0 : index
    %c0_3 = arith.constant 0 : index
    %1 = vector.load %arg2[%c0_2, %c0_3] : memref<1x32xf32, #tpu.memory_space<vmem>>, vector<1x32xf32>
    %2 = vector.shape_cast %1 : vector<1x32xf32> to vector<1x1x32xf32>
    %3 = vector.broadcast %2 : vector<1x1x32xf32> to vector<2x8x32xf32>
    %4 = arith.mulf %0, %3 : vector<2x8x32xf32>
    %cst = arith.constant dense<0.000000e+00> : vector<2x8xf32>
    %5 = vector.multi_reduction <add>, %4, %cst [2] : vector<2x8x32xf32> to vector<2x8xf32>
    %cst_4 = arith.constant dense<0xFF800000> : vector<2xf32>
    %6 = vector.multi_reduction <maximumf>, %5, %cst_4 [1] : vector<2x8xf32> to vector<2xf32>
    %7 = vector.shape_cast %6 : vector<2xf32> to vector<2x1xf32>
    %8 = vector.broadcast %7 : vector<2x1xf32> to vector<2x8xf32>
    %9 = arith.subf %5, %8 : vector<2x8xf32>
    %10 = math.exp %9 : vector<2x8xf32>
    %cst_5 = arith.constant dense<0.000000e+00> : vector<2xf32>
    %11 = vector.multi_reduction <add>, %10, %cst_5 [1] : vector<2x8xf32> to vector<2xf32>
    %12 = vector.shape_cast %11 : vector<2xf32> to vector<2x1xf32>
    %13 = vector.broadcast %12 : vector<2x1xf32> to vector<2x8xf32>
    %14 = arith.divf %10, %13 : vector<2x8xf32>
    %c0_6 = arith.constant 0 : index
    %c0_7 = arith.constant 0 : index
    %15 = vector.load %arg4[%c0_6, %c0_7] : memref<2x8xf32, #tpu.memory_space<vmem>>, vector<2x8xf32>
    tpu.vector_store %arg4[%c0_6, %c0_7], %14 {strides = array<i32>} : memref<2x8xf32, #tpu.memory_space<vmem>>, vector<2x8xf32>,
    %cst_8 = arith.constant dense<0.000000e+00> : vector<2x8xf32>
    %16 = vector.multi_reduction <add>, %4, %cst_8 [2] : vector<2x8x32xf32> to vector<2x8xf32>
    %17 = vector.shape_cast %16 : vector<2x8xf32> to vector<2x8x1xf32>
    %cst_9 = arith.constant dense<0xFF800000> : vector<2x1xf32>
    %18 = vector.multi_reduction <maximumf>, %17, %cst_9 [1] : vector<2x8x1xf32> to vector<2x1xf32>
    %19 = vector.shape_cast %18 : vector<2x1xf32> to vector<2x1x1xf32>
    %20 = vector.broadcast %19 : vector<2x1x1xf32> to vector<2x8x1xf32>
    %21 = arith.subf %17, %20 : vector<2x8x1xf32>
    %22 = math.exp %21 : vector<2x8x1xf32>
    %cst_10 = arith.constant dense<0.000000e+00> : vector<2x1xf32>
    %23 = vector.multi_reduction <add>, %22, %cst_10 [1] : vector<2x8x1xf32> to vector<2x1xf32>
    %24 = vector.shape_cast %23 : vector<2x1xf32> to vector<2x1x1xf32>
    %25 = vector.broadcast %24 : vector<2x1x1xf32> to vector<2x8x1xf32>
    %26 = arith.divf %22, %25 : vector<2x8x1xf32>
    %27 = vector.broadcast %26 : vector<2x8x1xf32> to vector<2x8x32xf32>
    %28 = arith.mulf %0, %27 : vector<2x8x32xf32>
    %cst_11 = arith.constant dense<0.000000e+00> : vector<2x32xf32>
    %29 = vector.multi_reduction <add>, %28, %cst_11 [1] : vector<2x8x32xf32> to vector<2x32xf32>
    %c0_12 = arith.constant 0 : index
    %c0_13 = arith.constant 0 : index
    %30 = vector.load %arg3[%c0_12, %c0_13] : memref<2x32xf32, #tpu.memory_space<vmem>>, vector<2x32xf32>
    tpu.vector_store %arg3[%c0_12, %c0_13], %29 {strides = array<i32>} : memref<2x32xf32, #tpu.memory_space<vmem>>, vector<2x32xf32>,
    return
  }
  func.func @transform_0(%arg0: i32) -> (i32, i32, i32) {
    %c0_i32 = arith.constant 0 : i32
    %c0_i32_0 = arith.constant 0 : i32
    %c0_i32_1 = arith.constant 0 : i32
    %c0_i32_2 = arith.constant 0 : i32
    return %c0_i32, %c0_i32_0, %c0_i32_1 : i32, i32, i32
  }
  func.func @transform_1(%arg0: i32) -> (i32, i32) {
    %c0_i32 = arith.constant 0 : i32
    %c0_i32_0 = arith.constant 0 : i32
    %c0_i32_1 = arith.constant 0 : i32
    return %c0_i32, %c0_i32_0 : i32, i32
  }
  func.func @transform_2(%arg0: i32) -> (i32, i32) {
    %c0_i32 = arith.constant 0 : i32
    %c0_i32_0 = arith.constant 0 : i32
    %c0_i32_1 = arith.constant 0 : i32
    return %c0_i32, %c0_i32_0 : i32, i32
  }
  func.func @transform_3(%arg0: i32) -> (i32, i32) {
    %c0_i32 = arith.constant 0 : i32
    %c0_i32_0 = arith.constant 0 : i32
    %c0_i32_1 = arith.constant 0 : i32
    return %c0_i32, %c0_i32_0 : i32, i32
  }
}

</mosaic_0001>

<llo_original>
// kernel: attention_pallas.1
$region0: #{attention_pallas.1}
  #allocation0 [shape = 'u32[]', space=smem, size = 0x4, offset = 0x4, fixed_abs, tag = 'smem constant byte address 0x4 - core index']
  #allocation1 [shape = 'u32[144,128]{1,0:T(1,128)}', space=vmem, size = 0x12000, scoped, tag = 'internal scratch']
  %s0 = inlined_call_operand.hbm [shape: f32[2,8,32], index: 0, kind: input, shape index: {}]
  %s1 = inlined_call_operand.vmem [shape: f32[1,32], index: 1, kind: input, shape index: {}]
  %s2 = inlined_call_operand.hbm [shape: f32[2,32], index: 2, kind: output, shape index: {0}]
  %s3 = inlined_call_operand.hbm [shape: f32[2,8], index: 3, kind: output, shape index: {1}]
  %4 = xla_tuple %s2, %s3
  %s5 = sld [smem:[#allocation0]]
  $region30: #{attention_pallas.1} parent=0
    _
  %s7 = ssub.s32 1, %s5
  %s8 = scalar_select 0, %s7, %s5
  $region1: #{attention_pallas.1} parent=0
    #allocation2 [shape = 'u8[8192]{0}', space=vmem, size = 0x2000, scoped, tag = 'input window, operand 0, single buffered']
    #allocation3 [shape = 's32[1]{0}', space=sflag, size = 0x4, scoped, tag = 'scoped memory for attention_pallas.1']
    #allocation4 [shape = 's32[1]{0}', space=sflag, size = 0x4, scoped, tag = 'scoped memory for attention_pallas.1']
    #allocation5 [shape = 'u8[1024]{0}', space=vmem, size = 0x400, scoped, tag = 'output window, operand 0, single buffered']
    #allocation6 [shape = 'u8[1024]{0}', space=vmem, size = 0x400, scoped, tag = 'output window, operand 1, single buffered']
    #allocation7 [shape = 's32[1]{0}', space=sflag, size = 0x4, scoped, tag = 'scoped memory for attention_pallas.1']
    %9 = vsyncpa [#allocation3], 0
    %10 = vsyncpa [#allocation4], 0
    %11 = vsyncpa [#allocation7], 0
    // Predicated region
    $region2: #{attention_pallas.1} parent=1 // pred_check
      _
    $region3: #{attention_pallas.1} parent=1 // pred_check_branch
      %13 = sbr.rel (0) target = $region5
    $region4: #{attention_pallas.1} parent=1 // pred_region
      %s15 = ssub.s32 256, 256
      %16 = vsyncadd [#allocation3], %s15
      %s17 = sshll.u32 [#allocation2], 4
      %s18 = int_to_ptr.vmem [resolvable:$true] %s17
      %23 = dma.hbm_to_vmem [thread:$0]  %s0, 256, %s18, [#allocation3], 128, 128, 8
    $region5: #{attention_pallas.1} parent=1 // pred_fallthru
      _
    // Predicated region
    $region6: #{attention_pallas.1} parent=1 // pred_check
      _
    $region7: #{attention_pallas.1} parent=1 // pred_check_branch
      %25 = sbr.rel (0) target = $region9
    $region8: #{attention_pallas.1} parent=1 // pred_region
      _
    $region9: #{attention_pallas.1} parent=1 // pred_fallthru
      _
    // Predicated region
    $region10: #{attention_pallas.1} parent=1 // pred_check
      _
    $region11: #{attention_pallas.1} parent=1 // pred_check_branch
      %27 = sbr.rel (0) target = $region13
    $region12: #{attention_pallas.1} parent=1 // pred_region
      %28 = dma.done [#allocation3], 256
    $region13: #{attention_pallas.1} parent=1 // pred_fallthru
      _
    %v29 = vld [vmem:[#allocation2] sm:$0xff]
    %v30 = vld [vmem:[#allocation2 + $0x8] sm:$0xff]
    %v31 = vld [vmem:[%s1] sm:$0x1]
    %v33 = vlaneseq
    %v34 = vshrl.u32 %v33, 7
    %v35 = vsub.s32 0, %v34
    %v36 = vrot.slane %v31, %v35
    %v38 = vmul.f32 %v29, %v36
    %v39 = vmul.f32 %v30, %v36
    %vm40 = vcmask 261120
    %v41 = vsel %vm40, %v38, 0.0
    %42 = vadd.xlane.f32.xlu0 %v41
    %v43 = vpop.xlane.xlu0 %42
    %v44 = vsel %vm40, %v39, 0.0
    %45 = vadd.xlane.f32.xlu0 %v44
    %v46 = vpop.xlane.xlu0 %45
    %v49 = vlaneseq
    %v50 = vand.u32 %v49, 127
    %v51 = vlaneseq
    %v52 = vshrl.u32 %v51, 7
    %v53 = vsub.s32 %v50, %v52
    %v54 = vrot.slane %v43, %v53
    %v55 = vlaneseq
    %v56 = vshrl.u32 %v55, 7
    %v57 = vsub.s32 %v50, %v56
    %v58 = vrot.slane %v46, %v57
    %vm59 = vcmask 1041409
    %v60 = vsel %vm59, %v58, %v54
    %vm62 = vcmask 58368
    %v63 = vsel %vm62, %v60, -inf
    %64 = vmax.xlane.f32.xlu0 %v63
    %v65 = vpop.xlane.xlu0 %64
    %v67 = vlaneseq
    %v68 = vshrl.u32 %v67, 7
    %v69 = vsub.s32 0, %v68
    %v70 = vrot.slane %v65, %v69
    %v71 = vlaneseq
    %v72 = vshrl.u32 %v71, 7
    %v73 = vsub.s32 1, %v72
    %v74 = vrot.slane %v65, %v73
    %v77 = vsub.f32 %v43, %v70
    %v78 = vsub.f32 %v46, %v74
    %v79 = vmul.f32 %v77, 1.442695
    %v80 = vpow.pop %v79
    %v81 = vmul.f32 %v78, 1.442695
    %v82 = vpow.pop %v81
    %85 = vset.pattern.permute.xlu0 0
    %86 = vperm.xlu0 %85, %v80
    %v87 = vpop.permute.xlu0 %86
    %88 = vset.pattern.permute.xlu0 0
    %89 = vperm.xlu0 %88, %v82
    %v90 = vpop.permute.xlu0 %89
    %v91 = vlaneseq
    %v92 = vshrl.u32 %v91, 7
    %v93 = vsub.s32 %v50, %v92
    %v94 = vrot.slane %v87, %v93
    %v95 = vlaneseq
    %v96 = vshrl.u32 %v95, 7
    %v97 = vsub.s32 %v50, %v96
    %v98 = vrot.slane %v90, %v97
    %v99 = vsel %vm59, %v98, %v94
    %v101 = vsel %vm62, %v99, 0.0
    %102 = vadd.xlane.f32.xlu0 %v101
    %v103 = vpop.xlane.xlu0 %102
    %v105 = vlaneseq
    %v106 = vshrl.u32 %v105, 7
    %v107 = vsub.s32 0, %v106
    %v108 = vrot.slane %v103, %v107
    %v109 = vlaneseq
    %v110 = vshrl.u32 %v109, 7
    %v111 = vsub.s32 1, %v110
    %v112 = vrot.slane %v103, %v111
    %v115 = vrcp.pop %v108
    %v116 = vmul.f32 %v80, %v115
    %v117 = vrcp.pop %v112
    %v118 = vmul.f32 %v82, %v117
    %121 = vset.pattern.permute.xlu0 0
    %122 = vperm.xlu0 %121, %v116
    %v123 = vpop.permute.xlu0 %122
    %124 = vset.pattern.permute.xlu0 0
    %125 = vperm.xlu0 %124, %v118
    %v126 = vpop.permute.xlu0 %125
    %v127 = vlaneseq
    %v128 = vshrl.u32 %v127, 7
    %v129 = vsub.s32 %v50, %v128
    %v130 = vrot.slane %v123, %v129
    %v131 = vlaneseq
    %v132 = vshrl.u32 %v131, 7
    %v133 = vsub.s32 %v50, %v132
    %v134 = vrot.slane %v126, %v133
    %v135 = vsel %vm59, %v134, %v130
    %137 = vst.msk [vmem:[#allocation6] sm:$0x3] %vm62, %v135
    %v138 = vrot.slane %v43, 4
    %v139 = vmax.f32 %v43, %v138
    %v140 = vrot.slane %v139, 2
    %v141 = vmax.f32 %v139, %v140
    %v142 = vrot.slane %v141, 1
    %v143 = vmax.f32 %v141, %v142
    %v144 = vrot.slane %v46, 4
    %v145 = vmax.f32 %v46, %v144
    %v146 = vrot.slane %v145, 2
    %v147 = vmax.f32 %v145, %v146
    %v148 = vrot.slane %v147, 1
    %v149 = vmax.f32 %v147, %v148
    %v150 = vsub.f32 %v43, %v143
    %v151 = vsub.f32 %v46, %v149
    %v152 = vmul.f32 %v150, 1.442695
    %v153 = vpow.pop %v152
    %v154 = vmul.f32 %v151, 1.442695
    %v155 = vpow.pop %v154
    %v156 = vrot.slane %v153, 4
    %v157 = vadd.f32 %v153, %v156
    %v158 = vrot.slane %v157, 2
    %v159 = vadd.f32 %v157, %v158
    %v160 = vrot.slane %v159, 1
    %v161 = vadd.f32 %v159, %v160
    %v162 = vrot.slane %v155, 4
    %v163 = vadd.f32 %v155, %v162
    %v164 = vrot.slane %v163, 2
    %v165 = vadd.f32 %v163, %v164
    %v166 = vrot.slane %v165, 1
    %v167 = vadd.f32 %v165, %v166
    %v168 = vrcp.pop %v161
    %v169 = vmul.f32 %v153, %v168
    %v170 = vrcp.pop %v167
    %v171 = vmul.f32 %v155, %v170
    %v172 = vmul.f32 %v29, %v169
    %v173 = vmul.f32 %v30, %v171
    %v174 = vsel %vm40, %v172, 0.0
    %v175 = vrot.slane %v174, 4
    %v176 = vadd.f32 %v174, %v175
    %v177 = vrot.slane %v176, 2
    %v178 = vadd.f32 %v176, %v177
    %v179 = vrot.slane %v178, 1
    %v180 = vadd.f32 %v178, %v179
    %v181 = vsel %vm40, %v173, 0.0
    %v182 = vrot.slane %v181, 4
    %v183 = vadd.f32 %v181, %v182
    %v184 = vrot.slane %v183, 2
    %v185 = vadd.f32 %v183, %v184
    %v186 = vrot.slane %v185, 1
    %v187 = vadd.f32 %v185, %v186
    %v190 = vsel %vm59, %v187, %v180
    %vm192 = vcmask 254976
    %193 = vst.msk [vmem:[#allocation5] sm:$0x3] %vm192, %v190
    // Predicated region
    $region14: #{attention_pallas.1} parent=1 // pred_check
      _
    $region15: #{attention_pallas.1} parent=1 // pred_check_branch
      %195 = sbr.rel (0) target = $region17
    $region16: #{attention_pallas.1} parent=1 // pred_region
      %s197 = ssub.s32 32, 32
      %198 = vsyncadd [#allocation4], %s197
      %s200 = sshll.u32 [#allocation5], 4
      %s201 = int_to_ptr.vmem [resolvable:$true] %s200
      %203 = dma.vmem_to_hbm [thread:$0]  %s201, 32, %s2, [#allocation4]
    $region17: #{attention_pallas.1} parent=1 // pred_fallthru
      _
    // Predicated region
    $region18: #{attention_pallas.1} parent=1 // pred_check
      _
    $region19: #{attention_pallas.1} parent=1 // pred_check_branch
      %205 = sbr.rel (0) target = $region21
    $region20: #{attention_pallas.1} parent=1 // pred_region
      %s207 = ssub.s32 32, 32
      %208 = vsyncadd [#allocation7], %s207
      %s210 = sshll.u32 [#allocation6], 4
      %s211 = int_to_ptr.vmem [resolvable:$true] %s210
      %213 = dma.vmem_to_hbm [thread:$0]  %s211, 32, %s3, [#allocation7]
    $region21: #{attention_pallas.1} parent=1 // pred_fallthru
      _
    // Predicated region
    $region22: #{attention_pallas.1} parent=1 // pred_check
      _
    $region23: #{attention_pallas.1} parent=1 // pred_check_branch
      %215 = sbr.rel (0) target = $region25
    $region24: #{attention_pallas.1} parent=1 // pred_region
      %216 = dma.done [#allocation4], 32
    $region25: #{attention_pallas.1} parent=1 // pred_fallthru
      _
    // Predicated region
    $region26: #{attention_pallas.1} parent=1 // pred_check
      _
    $region27: #{attention_pallas.1} parent=1 // pred_check_branch
      %218 = sbr.rel (0) target = $region29
    $region28: #{attention_pallas.1} parent=1 // pred_region
      %219 = dma.done [#allocation7], 32
    $region29: #{attention_pallas.1} parent=1 // pred_fallthru
      _
    %220 = vsyncpa [#allocation3], 1
    %221 = vsyncpa [#allocation4], 1
    %222 = vsyncpa [#allocation7], 1

</llo_original>
